<compile_context>
chip_gen: v5e
topology: v5e:2x2
jax: 0.10.0
libtpu: 0.0.40
codegen_flags: <defaults>
</compile_context>

<pallas_src>
import jax
import jax.numpy as jnp
from jax import lax
from jax.experimental import pallas as pl
from jax.experimental.pallas import tpu as pltpu


def _mlp_kernel(x_ref, w1t_ref, b1_ref, w2c_ref, b2_ref, o_ref):
    # x_ref   : (TB, D)  current batch tile (f32 or bf16)
    # w1t_ref : (H, D)   first-layer weight, VMEM-resident across grid steps
    # b1_ref  : (H, 1)   f32
    # w2c_ref : (H, 1)   f32 second-layer weight column
    # b2_ref  : (1,)     f32 scalar bias in SMEM
    # o_ref   : (1, TB)  lane-dense output row for this tile
    # Layer 1 on the MXU with the x-transpose folded into the operand feed:
    # (H, D) x (TB, D)^T -> (H, TB), f32 accumulation.
    h = lax.dot_general(
        w1t_ref[...], x_ref[...],
        dimension_numbers=(((1,), (1,)), ((), ())),
        preferred_element_type=jnp.float32)
    h = jnp.maximum(h + b1_ref[...], 0.0)                     # bias + ReLU on the VPU
    # Layer 2 as VPU multiply + sublane reduce (XLU) instead of a 1-row matmul.
    y = jnp.sum(h * w2c_ref[...], axis=0, keepdims=True)      # (1, TB)
    o_ref[...] = (y + b2_ref[0]).astype(o_ref.dtype)          # lane-dense store


def _round_up(n, m):
    return ((n + m - 1) // m) * m


def _cdiv(a, b):
    return -(-a // b)


def _pick_tile(B, D, block_rows=None):
    """Pick the batch-tile size (rows per grid step)."""
    if block_rows is None:
        # Keep one x tile <= ~8 MiB so two double-buffered copies + weights +
        # output stay far under the 32 MiB scoped-VMEM budget (v7x-safe).
        bytes_per_row = max(4 * D, 1)
        cap = max(128, ((8 << 20) // bytes_per_row) // 128 * 128)
        tb = min(4096, cap)
        # Megacore (v7x): make sure there are >=2 (>=4 for big batches) grid
        # blocks so dimension_semantics=("parallel",) has something to shard.
        if B > 512:
            tb = min(tb, max(128, _round_up(_cdiv(B, 4), 128)))
        elif B > 256:
            tb = min(tb, max(128, _round_up(_cdiv(B, 2), 128)))
    else:
        tb = max(8, int(block_rows))
    if tb >= B:
        return B                      # single full-array block: no masking at all
    tb = _round_up(tb, 128)           # multi-block: keep lane/sublane alignment
    return tb if tb < B else B


def neural_net_forward(x, w1, b1, w2, b2, *, block_rows=None, use_bf16_inputs=False):
    """x: (B, D) f32, w1: (D, 64), b1: (64,), w2: (64, 1), b2: (1,) -> (B,) f32."""
    B, D = x.shape
    H = w1.shape[1]
    # Guard against silently-wrong results from torch-layout weights.
    assert w1.shape == (D, H), f"w1 must be (input_dim, {H}) = ({D}, {H}), got {w1.shape}"
    assert b1.shape == (H,) and w2.shape == (H, 1) and b2.shape == (1,)

    tb = _pick_tile(B, D, block_rows)
    num_blocks = _cdiv(B, tb)

    # Reshape params once (tiny; stay VMEM/SMEM-resident for all grid steps).
    w1t = jnp.transpose(w1)                       # (H, D)
    b1c = b1.reshape(H, 1).astype(jnp.float32)    # broadcasts over the lane (batch) dim
    w2c = w2.reshape(H, 1).astype(jnp.float32)
    b2s = b2.reshape(1).astype(jnp.float32)

    if use_bf16_inputs:
        # Halves the dominant HBM read traffic (x) and avoids multi-pass f32
        # MXU on v5e; accumulation stays f32 inside the kernel.
        x_in = x.astype(jnp.bfloat16)
        w1t = w1t.astype(jnp.bfloat16)
        in_bytes = 2
    else:
        x_in = x
        in_bytes = 4

    cost = pl.CostEstimate(
        flops=int(2 * B * H * (D + 1)),
        transcendentals=0,
        bytes_accessed=int(in_bytes * (B * D + D * H) + 4 * (B + 3 * H + 1)),
    )

    out = pl.pallas_call(
        _mlp_kernel,
        out_shape=jax.ShapeDtypeStruct((1, B), jnp.float32),
        grid=(num_blocks,),
        in_specs=[
            pl.BlockSpec((tb, D), lambda i: (i, 0)),            # x: tiled over batch (ragged tail masked)
            pl.BlockSpec((H, D), lambda i: (0, 0)),             # W1^T: resident
            pl.BlockSpec((H, 1), lambda i: (0, 0)),             # b1: resident
            pl.BlockSpec((H, 1), lambda i: (0, 0)),             # w2 column: resident
            pl.BlockSpec(memory_space=pltpu.MemorySpace.SMEM),  # b2 scalar
        ],
        out_specs=pl.BlockSpec((1, tb), lambda i: (0, i)),      # lane-dense output row
        compiler_params=pltpu.CompilerParams(
            dimension_semantics=("parallel",),                  # v7x: 2 TCs share the batch grid
            vmem_limit_bytes=32 * 1024 * 1024,                  # v7x-safe scoped-VMEM budget
        ),
        cost_estimate=cost,
    )(x_in, w1t, b1c, w2c, b2s)

    # NOTE: do not fuse any reduction over `out` before this slice; any lanes
    # past B (ragged last block) are never written to HBM, and out is exactly
    # (1, B) here, so out[0] == torch's .squeeze(1).
    return out[0]


def mse_loss(pred, target):
    """NeuralNet.cal_loss: mean-reduced MSE (plain JAX glue around the kernel)."""
    return jnp.mean((pred - target) ** 2)


def init_params(key, input_dim, hidden=64):
    # Deterministic synthetic init (PyTorch-Linear-like uniform ranges).
    k1, k2, k3, k4 = jax.random.split(key, 4)
    lim1 = 1.0 / jnp.sqrt(input_dim)
    lim2 = 1.0 / jnp.sqrt(hidden)
    w1 = jax.random.uniform(k1, (input_dim, hidden), jnp.float32, -lim1, lim1)
    b1 = jax.random.uniform(k2, (hidden,), jnp.float32, -lim1, lim1)
    w2 = jax.random.uniform(k3, (hidden, 1), jnp.float32, -lim2, lim2)
    b2 = jax.random.uniform(k4, (1,), jnp.float32, -lim2, lim2)
    return w1, b1, w2, b2


if __name__ == "__main__":
    key = jax.random.PRNGKey(0)
    k_x, k_p, k_t, k_x2 = jax.random.split(key, 4)

    batch, input_dim = 8, 128
    x = jax.random.normal(k_x, (batch, input_dim), jnp.float32)
    w1, b1, w2, b2 = init_params(k_p, input_dim)
    target = jax.random.normal(k_t, (batch,), jnp.float32)

    # f32 parity path: single full-array block (no masking, no padding).
    pred = neural_net_forward(x, w1, b1, w2, b2)
    pred = jax.block_until_ready(pred)
    ref = (jnp.maximum(x @ w1 + b1, 0.0) @ w2 + b2)[:, 0]
    assert pred.shape == (batch,)
    assert jnp.allclose(pred, ref, atol=1e-4, rtol=1e-4)

    # Multi-block grid with a ragged last block (no wrapper-side padding):
    # exercises the batch grid, masked tail stores and weight residency.
    batch2 = 300
    x2 = jax.random.normal(k_x2, (batch2, input_dim), jnp.float32)
    pred2 = neural_net_forward(x2, w1, b1, w2, b2, block_rows=128)
    pred2 = jax.block_until_ready(pred2)
    ref2 = (jnp.maximum(x2 @ w1 + b1, 0.0) @ w2 + b2)[:, 0]
    assert pred2.shape == (batch2,)
    assert jnp.allclose(pred2, ref2, atol=1e-4, rtol=1e-4)

    # Optional bf16-input fast path (f32 accumulation); looser tolerance.
    pred_bf16 = neural_net_forward(x, w1, b1, w2, b2, use_bf16_inputs=True)
    pred_bf16 = jax.block_until_ready(pred_bf16)
    assert pred_bf16.shape == (batch,)
    assert jnp.allclose(pred_bf16, ref, atol=5e-2, rtol=5e-2)

    loss = mse_loss(pred, target)
    jax.block_until_ready(loss)

    print("KERNEL_OK")
</pallas_src>

<mosaic_0001>
module attributes {stable_mosaic.version = 11 : i64} {
  func.func @_mlp_kernel(%arg0: i32, %arg1: memref<8x128xf32, #tpu.memory_space<vmem>>, %arg2: memref<64x128xf32, #tpu.memory_space<vmem>>, %arg3: memref<64x1xf32, #tpu.memory_space<vmem>>, %arg4: memref<64x1xf32, #tpu.memory_space<vmem>>, %arg5: memref<1xf32, #tpu.memory_space<smem>>, %arg6: memref<1x8xf32, #tpu.memory_space<vmem>>) attributes {dimension_semantics = [#tpu.dimension_semantics<parallel>], iteration_bounds = array<i64: 1>, scalar_prefetch = 0 : i64, scratch_operands = 0 : i64, tpu.core_type = #tpu.core_type<tc>, window_params = [{transform_indices = @transform_0, window_bounds = array<i64: 8, 128>}, {pipeline_mode = #tpu.pipeline_mode<synchronous>, transform_indices = @transform_1, window_bounds = array<i64: 64, 128>}, {pipeline_mode = #tpu.pipeline_mode<synchronous>, transform_indices = @transform_2, window_bounds = array<i64: 64, 1>}, {pipeline_mode = #tpu.pipeline_mode<synchronous>, transform_indices = @transform_3, window_bounds = array<i64: 64, 1>}, {transform_indices = @transform_4, window_bounds = array<i64: 1>}, {transform_indices = @transform_5, window_bounds = array<i64: 1, 8>}]} {
    %c0 = arith.constant 0 : index
    %c0_0 = arith.constant 0 : index
    %0 = vector.load %arg2[%c0, %c0_0] : memref<64x128xf32, #tpu.memory_space<vmem>>, vector<64x128xf32>
    %c0_1 = arith.constant 0 : index
    %c0_2 = arith.constant 0 : index
    %1 = vector.load %arg1[%c0_1, %c0_2] : memref<8x128xf32, #tpu.memory_space<vmem>>, vector<8x128xf32>
    %cst = arith.constant dense<0.000000e+00> : vector<64x8xf32>
    %2 = tpu.matmul %0, %1, %cst {dimension_numbers = #tpu.dot_dimension_numbers<[1], [1], [0], [0], [0, 0, 1, 0], [], []>} : vector<64x128xf32>, vector<8x128xf32>, vector<64x8xf32> -> vector<64x8xf32>
    %c0_3 = arith.constant 0 : index
    %c0_4 = arith.constant 0 : index
    %3 = vector.load %arg3[%c0_3, %c0_4] : memref<64x1xf32, #tpu.memory_space<vmem>>, vector<64x1xf32>
    %4 = vector.broadcast %3 : vector<64x1xf32> to vector<64x8xf32>
    %5 = arith.addf %2, %4 : vector<64x8xf32>
    %cst_5 = arith.constant 0.000000e+00 : f32
    %6 = vector.broadcast %cst_5 : f32 to vector<64x8xf32>
    %7 = arith.maximumf %5, %6 : vector<64x8xf32>
    %c0_6 = arith.constant 0 : index
    %c0_7 = arith.constant 0 : index
    %8 = vector.load %arg4[%c0_6, %c0_7] : memref<64x1xf32, #tpu.memory_space<vmem>>, vector<64x1xf32>
    %9 = vector.broadcast %8 : vector<64x1xf32> to vector<64x8xf32>
    %10 = arith.mulf %7, %9 : vector<64x8xf32>
    %cst_8 = arith.constant dense<0.000000e+00> : vector<8xf32>
    %11 = vector.multi_reduction <add>, %10, %cst_8 [0] : vector<64x8xf32> to vector<8xf32>
    %12 = vector.shape_cast %11 : vector<8xf32> to vector<1x8xf32>
    %c0_9 = arith.constant 0 : index
    %13 = memref.load %arg5[%c0_9] : memref<1xf32, #tpu.memory_space<smem>>
    %14 = vector.broadcast %13 : f32 to vector<1x8xf32>
    %15 = arith.addf %12, %14 : vector<1x8xf32>
    %c0_10 = arith.constant 0 : index
    %c0_11 = arith.constant 0 : index
    %16 = vector.load %arg6[%c0_10, %c0_11] : memref<1x8xf32, #tpu.memory_space<vmem>>, vector<1x8xf32>
    tpu.vector_store %arg6[%c0_10, %c0_11], %15 {strides = array<i32>} : memref<1x8xf32, #tpu.memory_space<vmem>>, vector<1x8xf32>,
    return
  }
  func.func @transform_0(%arg0: i32) -> (i32, i32) {
    %c0_i32 = arith.constant 0 : i32
    %c0_i32_0 = arith.constant 0 : i32
    return %arg0, %c0_i32 : i32, i32
  }
  func.func @transform_1(%arg0: i32) -> (i32, i32) {
    %c0_i32 = arith.constant 0 : i32
    %c0_i32_0 = arith.constant 0 : i32
    %c0_i32_1 = arith.constant 0 : i32
    return %c0_i32, %c0_i32_0 : i32, i32
  }
  func.func @transform_2(%arg0: i32) -> (i32, i32) {
    %c0_i32 = arith.constant 0 : i32
    %c0_i32_0 = arith.constant 0 : i32
    %c0_i32_1 = arith.constant 0 : i32
    return %c0_i32, %c0_i32_0 : i32, i32
  }
  func.func @transform_3(%arg0: i32) -> (i32, i32) {
    %c0_i32 = arith.constant 0 : i32
    %c0_i32_0 = arith.constant 0 : i32
    %c0_i32_1 = arith.constant 0 : i32
    return %c0_i32, %c0_i32_0 : i32, i32
  }
  func.func @transform_4(%arg0: i32) -> i32 {
    %c0_i32 = arith.constant 0 : i32
    %c0_i32_0 = arith.constant 0 : i32
    return %c0_i32 : i32
  }
  func.func @transform_5(%arg0: i32) -> (i32, i32) {
    %c0_i32 = arith.constant 0 : i32
    %c0_i32_0 = arith.constant 0 : i32
    return %c0_i32, %arg0 : i32, i32
  }
}

</mosaic_0001>

<llo_original>
// kernel: tpu_custom_call.1
$region0: #{tpu_custom_call.1}
  #allocation0 [shape = 'u32[]', space=smem, size = 0x4, offset = 0x4, fixed_abs, tag = 'smem constant byte address 0x4 - core index']
  #allocation1 [shape = 'u32[72,128]{1,0:T(1,128)}', space=vmem, size = 0x9000, scoped, tag = 'internal scratch']
  #allocation2 [shape = 'f32[1]{0:T(128)S(6)}', space=smem, size = 0x200, scoped, tag = 'scoped memory for tpu_custom_call.1']
  %s0 = inlined_call_operand.vmem [shape: f32[8,128], index: 0, kind: input, shape index: {}]
  %s1 = inlined_call_operand.vmem [shape: f32[64,128], index: 1, kind: input, shape index: {}]
  %s2 = inlined_call_operand.vmem [shape: f32[64,1], index: 2, kind: input, shape index: {}]
  %s3 = inlined_call_operand.vmem [shape: f32[64,1], index: 3, kind: input, shape index: {}]
  %s4 = inlined_call_operand.<no memory space> [shape: f32[1], index: 4, kind: input, shape index: {}]
  %s5 = inlined_call_operand.hbm [shape: f32[1,8], index: 5, kind: output, shape index: {}]
  %s6 = sld [smem:[#allocation0]]
  $region30: #{tpu_custom_call.1} parent=0
    _
  %s8 = ssub.s32 1, %s6
  %s9 = scalar_select 0, %s8, %s6
  %10 = sst [smem:[#allocation2]] %s4
  $region1: #{tpu_custom_call.1} parent=0
    #allocation3 [shape = 'u8[512]{0}', space=vmem, size = 0x400, scoped, tag = 'output window, operand 0, single buffered']
    #allocation4 [shape = 's32[1]{0}', space=sflag, size = 0x4, scoped, tag = 'scoped memory for tpu_custom_call.1']
    %11 = vsyncpa [#allocation4], 0
    // Predicated region
    $region2: #{tpu_custom_call.1} parent=1 // pred_check
      _
    $region3: #{tpu_custom_call.1} parent=1 // pred_check_branch
      %13 = sbr.rel (0) target = $region5
    $region4: #{tpu_custom_call.1} parent=1 // pred_region
      _
    $region5: #{tpu_custom_call.1} parent=1 // pred_fallthru
      _
    // Predicated region
    $region6: #{tpu_custom_call.1} parent=1 // pred_check
      _
    $region7: #{tpu_custom_call.1} parent=1 // pred_check_branch
      %15 = sbr.rel (0) target = $region9
    $region8: #{tpu_custom_call.1} parent=1 // pred_region
      _
    $region9: #{tpu_custom_call.1} parent=1 // pred_fallthru
      _
    // Predicated region
    $region10: #{tpu_custom_call.1} parent=1 // pred_check
      _
    $region11: #{tpu_custom_call.1} parent=1 // pred_check_branch
      %17 = sbr.rel (0) target = $region13
    $region12: #{tpu_custom_call.1} parent=1 // pred_region
      _
    $region13: #{tpu_custom_call.1} parent=1 // pred_fallthru
      _
    // Predicated region
    $region14: #{tpu_custom_call.1} parent=1 // pred_check
      _
    $region15: #{tpu_custom_call.1} parent=1 // pred_check_branch
      %19 = sbr.rel (0) target = $region17
    $region16: #{tpu_custom_call.1} parent=1 // pred_region
      _
    $region17: #{tpu_custom_call.1} parent=1 // pred_fallthru
      _
    // Predicated region
    $region18: #{tpu_custom_call.1} parent=1 // pred_check
      _
    $region19: #{tpu_custom_call.1} parent=1 // pred_check_branch
      %21 = sbr.rel (0) target = $region21
    $region20: #{tpu_custom_call.1} parent=1 // pred_region
      _
    $region21: #{tpu_custom_call.1} parent=1 // pred_fallthru
      _
    %v22 = vld [vmem:[%s1] sm:$0xff]
    %v23 = vld [vmem:[%s1 + $0x8] sm:$0xff]
    %v24 = vld [vmem:[%s1 + $0x10] sm:$0xff]
    %v25 = vld [vmem:[%s1 + $0x18] sm:$0xff]
    %v26 = vld [vmem:[%s1 + $0x20] sm:$0xff]
    %v27 = vld [vmem:[%s1 + $0x28] sm:$0xff]
    %v28 = vld [vmem:[%s1 + $0x30] sm:$0xff]
    %v29 = vld [vmem:[%s1 + $0x38] sm:$0xff]
    %v30 = vld [vmem:[%s0] sm:$0xff]
    %v31 = vld [vmem:[%s2] sm:$0xff]
    %v32 = vld [vmem:[%s2 + $0x8] sm:$0xff]
    %v33 = vld [vmem:[%s2 + $0x10] sm:$0xff]
    %v34 = vld [vmem:[%s2 + $0x18] sm:$0xff]
    %v35 = vld [vmem:[%s2 + $0x20] sm:$0xff]
    %v36 = vld [vmem:[%s2 + $0x28] sm:$0xff]
    %v37 = vld [vmem:[%s2 + $0x30] sm:$0xff]
    %v38 = vld [vmem:[%s2 + $0x38] sm:$0xff]
    %40 = vset.pattern.permute.xlu0 0
    %41 = vperm.xlu0 %40, %v31
    %v42 = vpop.permute.xlu0 %41
    %45 = vset.pattern.permute.xlu0 0
    %46 = vperm.xlu0 %45, %v32
    %v47 = vpop.permute.xlu0 %46
    %50 = vset.pattern.permute.xlu0 0
    %51 = vperm.xlu0 %50, %v33
    %v52 = vpop.permute.xlu0 %51
    %55 = vset.pattern.permute.xlu0 0
    %56 = vperm.xlu0 %55, %v34
    %v57 = vpop.permute.xlu0 %56
    %60 = vset.pattern.permute.xlu0 0
    %61 = vperm.xlu0 %60, %v35
    %v62 = vpop.permute.xlu0 %61
    %65 = vset.pattern.permute.xlu0 0
    %66 = vperm.xlu0 %65, %v36
    %v67 = vpop.permute.xlu0 %66
    %70 = vset.pattern.permute.xlu0 0
    %71 = vperm.xlu0 %70, %v37
    %v72 = vpop.permute.xlu0 %71
    %75 = vset.pattern.permute.xlu0 0
    %76 = vperm.xlu0 %75, %v38
    %v77 = vpop.permute.xlu0 %76
    %79 = vmatpush.xpose.msra.mxu0 0.0
    %80 = vmatpush.xpose.msra.mxu0 0.0
    %81 = vmatpush.xpose.msra.mxu0 0.0
    %82 = vmatpush.xpose.msra.mxu0 0.0
    %83 = vmatpush.xpose.msra.mxu0 0.0
    %84 = vmatpush.xpose.msra.mxu0 0.0
    %85 = vmatpush.xpose.msra.mxu0 0.0
    %86 = vmatpush.xpose.msra.mxu0 0.0
    %87 = vmatpush.xpose.msra.mxu0 0.0
    %88 = vmatpush.xpose.msra.mxu0 0.0
    %89 = vmatpush.xpose.msra.mxu0 0.0
    %90 = vmatpush.xpose.msra.mxu0 0.0
    %91 = vmatpush.xpose.msra.mxu0 0.0
    %92 = vmatpush.xpose.msra.mxu0 0.0
    %93 = vmatpush.xpose.msra.mxu0 0.0
    %94 = vmatpush.xpose.msra.mxu0 %v30
    %95 = vmatmul.f32.gmra.mxu0 %v22
    %v96 = vpop.f32.mrf.mxu0
    %v97 = vadd.f32 %v42, %v96
    %98 = vmatmul.f32.gmra.mxu0 %v23
    %v99 = vpop.f32.mrf.mxu0
    %v100 = vadd.f32 %v47, %v99
    %101 = vmatmul.f32.gmra.mxu0 %v24
    %v102 = vpop.f32.mrf.mxu0
    %v103 = vadd.f32 %v52, %v102
    %104 = vmatmul.f32.gmra.mxu0 %v25
    %v105 = vpop.f32.mrf.mxu0
    %v106 = vadd.f32 %v57, %v105
    %107 = vmatmul.f32.gmra.mxu0 %v26
    %v108 = vpop.f32.mrf.mxu0
    %v109 = vadd.f32 %v62, %v108
    %110 = vmatmul.f32.gmra.mxu0 %v27
    %v111 = vpop.f32.mrf.mxu0
    %v112 = vadd.f32 %v67, %v111
    %113 = vmatmul.f32.gmra.mxu0 %v28
    %v114 = vpop.f32.mrf.mxu0
    %v115 = vadd.f32 %v72, %v114
    %116 = vmatmul.f32.gmra.mxu0 %v29
    %v117 = vpop.f32.mrf.mxu0
    %v118 = vadd.f32 %v77, %v117
    %119 = vdwg.mxu0
    %v120 = vmax.f32 %v97, 0.0
    %v121 = vmax.f32 %v100, 0.0
    %v122 = vmax.f32 %v103, 0.0
    %v123 = vmax.f32 %v106, 0.0
    %v124 = vmax.f32 %v109, 0.0
    %v125 = vmax.f32 %v112, 0.0
    %v126 = vmax.f32 %v115, 0.0
    %v127 = vmax.f32 %v118, 0.0
    %v128 = vld [vmem:[%s3] sm:$0xff]
    %v129 = vld [vmem:[%s3 + $0x8] sm:$0xff]
    %v130 = vld [vmem:[%s3 + $0x10] sm:$0xff]
    %v131 = vld [vmem:[%s3 + $0x18] sm:$0xff]
    %v132 = vld [vmem:[%s3 + $0x20] sm:$0xff]
    %v133 = vld [vmem:[%s3 + $0x28] sm:$0xff]
    %v134 = vld [vmem:[%s3 + $0x30] sm:$0xff]
    %v135 = vld [vmem:[%s3 + $0x38] sm:$0xff]
    %137 = vset.pattern.permute.xlu0 0
    %138 = vperm.xlu0 %137, %v128
    %v139 = vpop.permute.xlu0 %138
    %142 = vset.pattern.permute.xlu0 0
    %143 = vperm.xlu0 %142, %v129
    %v144 = vpop.permute.xlu0 %143
    %147 = vset.pattern.permute.xlu0 0
    %148 = vperm.xlu0 %147, %v130
    %v149 = vpop.permute.xlu0 %148
    %152 = vset.pattern.permute.xlu0 0
    %153 = vperm.xlu0 %152, %v131
    %v154 = vpop.permute.xlu0 %153
    %157 = vset.pattern.permute.xlu0 0
    %158 = vperm.xlu0 %157, %v132
    %v159 = vpop.permute.xlu0 %158
    %162 = vset.pattern.permute.xlu0 0
    %163 = vperm.xlu0 %162, %v133
    %v164 = vpop.permute.xlu0 %163
    %167 = vset.pattern.permute.xlu0 0
    %168 = vperm.xlu0 %167, %v134
    %v169 = vpop.permute.xlu0 %168
    %172 = vset.pattern.permute.xlu0 0
    %173 = vperm.xlu0 %172, %v135
    %v174 = vpop.permute.xlu0 %173
    %v176 = vmul.f32 %v120, %v139
    %v177 = vmul.f32 %v121, %v144
    %v178 = vmul.f32 %v122, %v149
    %v179 = vmul.f32 %v123, %v154
    %v180 = vmul.f32 %v124, %v159
    %v181 = vmul.f32 %v125, %v164
    %v182 = vmul.f32 %v126, %v169
    %v183 = vmul.f32 %v127, %v174
    %vm184 = vcmask 64512
    %v185 = vsel %vm184, %v176, 0.0
    %v186 = vsel %vm184, %v177, 0.0
    %v187 = vadd.f32 %v185, %v186
    %v188 = vsel %vm184, %v178, 0.0
    %v189 = vadd.f32 %v187, %v188
    %v190 = vsel %vm184, %v179, 0.0
    %v191 = vadd.f32 %v189, %v190
    %v192 = vsel %vm184, %v180, 0.0
    %v193 = vadd.f32 %v191, %v192
    %v194 = vsel %vm184, %v181, 0.0
    %v195 = vadd.f32 %v193, %v194
    %v196 = vsel %vm184, %v182, 0.0
    %v197 = vadd.f32 %v195, %v196
    %v198 = vsel %vm184, %v183, 0.0
    %v199 = vadd.f32 %v197, %v198
    %v200 = vrot.slane %v199, 4
    %v201 = vadd.f32 %v199, %v200
    %v202 = vrot.slane %v201, 2
    %v203 = vadd.f32 %v201, %v202
    %v204 = vrot.slane %v203, 1
    %v205 = vadd.f32 %v203, %v204
    %s206 = sld [smem:[#allocation2]]
    %v207 = vstv %s206
    %v208 = vadd.f32 %v205, %v207
    %vm209 = vcmask 57344
    %210 = vst.msk [vmem:[#allocation3] sm:$0x1] %vm209, %v208
    // Predicated region
    $region22: #{tpu_custom_call.1} parent=1 // pred_check
      _
    $region23: #{tpu_custom_call.1} parent=1 // pred_check_branch
      %212 = sbr.rel (0) target = $region25
    $region24: #{tpu_custom_call.1} parent=1 // pred_region
      %214 = vsyncadd [#allocation4], 0
      %s216 = sshll.u32 [#allocation3], 4
      %s217 = int_to_ptr.vmem [resolvable:$true] %s216
      %s218 = sshll.u32 %s5, 4
      %s219 = int_to_ptr.hbm [resolvable:$true] %s218
      %221 = dma.vmem_to_hbm [thread:$0]  %s217, 16, %s219, [#allocation4]
    $region25: #{tpu_custom_call.1} parent=1 // pred_fallthru
      _
    // Predicated region
    $region26: #{tpu_custom_call.1} parent=1 // pred_check
      _
    $region27: #{tpu_custom_call.1} parent=1 // pred_check_branch
      %223 = sbr.rel (0) target = $region29
    $region28: #{tpu_custom_call.1} parent=1 // pred_region
      %225 = dma.done [#allocation4], 16
    $region29: #{tpu_custom_call.1} parent=1 // pred_fallthru
      _
    %226 = vsyncpa [#allocation4], 1

</llo_original>
